<compile_context>
chip_gen: v7x
topology: tpu7x:2x2x1
jax: 0.10.0
libtpu: 0.0.40
codegen_flags: <defaults>
</compile_context>

<pallas_src>
import jax
import jax.numpy as jnp
from jax import lax
from jax.scipy.linalg import cho_solve
from jax.experimental import pallas as pl
from jax.experimental.pallas import tpu as pltpu

JITTER = 1e-4
_BIG = 1e6                       # squared distance for padded z columns -> exp == 0
_VMEM_LIMIT = 64 * 1024 * 1024   # <= physical VMEM on v5e/v6e/v7x


# ----------------------------------------------------------------------------
# helpers
# ----------------------------------------------------------------------------
def _round_up(x, m):
    return (x + m - 1) // m * m


def _choose_tile(n, target):
    """Row/col tile: full (128-aligned) extent if small, else `target`."""
    n128 = _round_up(max(int(n), 1), 128)
    return n128 if n128 <= target else target


# ----------------------------------------------------------------------------
# Pallas kernel 1: row-tiled scaled RBF cross kernel (used for Kzz only)
#   K[i, j] = outputscale * exp(-0.5 * ||a_i/ls - z_j/ls||^2)
# a-side scaled rows + norms and z-side scaled rows + norms are hoisted.
# ----------------------------------------------------------------------------
def _rbf_rows_kernel(params_ref, as_ref, a2_ref, zs_ref, z2_ref, out_ref):
    outputscale = params_ref[0]
    ab = lax.dot_general(as_ref[...], zs_ref[...], (((1,), (1,)), ((), ())),
                         preferred_element_type=jnp.float32)          # (TR, Mp)
    sq = jnp.maximum(a2_ref[...] + z2_ref[...] - 2.0 * ab, 0.0)
    out_ref[...] = outputscale * jnp.exp(-0.5 * sq)


def _rbf_rows(a_scaled, a2_col, z_scaled, z2_row, params, row_tile):
    R, D = a_scaled.shape
    Mp = z_scaled.shape[0]
    grid_spec = pltpu.PrefetchScalarGridSpec(
        num_scalar_prefetch=1,
        grid=(R // row_tile,),
        in_specs=[
            pl.BlockSpec((row_tile, D), lambda r, p: (r, 0)),
            pl.BlockSpec((row_tile, 1), lambda r, p: (r, 0)),
            pl.BlockSpec((Mp, D), lambda r, p: (0, 0)),
            pl.BlockSpec((1, Mp), lambda r, p: (0, 0)),
        ],
        out_specs=pl.BlockSpec((row_tile, Mp), lambda r, p: (r, 0)),
    )
    return pl.pallas_call(
        _rbf_rows_kernel,
        out_shape=jax.ShapeDtypeStruct((R, Mp), jnp.float32),
        grid_spec=grid_spec,
        compiler_params=pltpu.CompilerParams(
            dimension_semantics=("parallel",)),
    )(params, a_scaled, a2_col, z_scaled, z2_row)


# ----------------------------------------------------------------------------
# Pallas kernel 2: fused row-tiled pass
#   kxz = RBF(x_tile, z)        (Mp lane-dense, padded cols exactly 0)
#   ac  = kxz @ C
#   mu  = kxz @ v               (stored lane-dense as (1, TR))
#   var = outputscale + rowsum(ac * kxz)   (diag variant only)
# Full-cov variant writes kxz/ac/mu; diag variant writes only mu/var (Kxz and
# AC never touch HBM on the diag path).
# ----------------------------------------------------------------------------
def _kxz_ac_mu(params_ref, xs_ref, x2_ref, zs_ref, z2_ref, c_ref, v_ref):
    outputscale = params_ref[0]
    xz = lax.dot_general(xs_ref[...], zs_ref[...], (((1,), (1,)), ((), ())),
                         preferred_element_type=jnp.float32)          # (TR, Mp)
    sq = jnp.maximum(x2_ref[...] + z2_ref[...] - 2.0 * xz, 0.0)
    kxz = outputscale * jnp.exp(-0.5 * sq)                            # (TR, Mp)
    ac = jnp.dot(kxz, c_ref[...], preferred_element_type=jnp.float32)  # (TR, Mp)
    mu = lax.dot_general(v_ref[...], kxz, (((1,), (1,)), ((), ())),
                         preferred_element_type=jnp.float32)          # (1, TR)
    return outputscale, kxz, ac, mu


def _fused_rows_full_kernel(params_ref, xs_ref, x2_ref, zs_ref, z2_ref, c_ref,
                            v_ref, kxz_ref, ac_ref, mu_ref):
    _, kxz, ac, mu = _kxz_ac_mu(params_ref, xs_ref, x2_ref, zs_ref, z2_ref,
                                c_ref, v_ref)
    kxz_ref[...] = kxz
    ac_ref[...] = ac
    mu_ref[...] = mu


def _fused_rows_diag_kernel(params_ref, xs_ref, x2_ref, zs_ref, z2_ref, c_ref,
                            v_ref, mu_ref, var_ref):
    outputscale, kxz, ac, mu = _kxz_ac_mu(params_ref, xs_ref, x2_ref, zs_ref,
                                          z2_ref, c_ref, v_ref)
    mu_ref[...] = mu
    var_ref[...] = (outputscale + jnp.sum(ac * kxz, axis=-1))[None, :]


def _fused_in_specs(D, Mp, t):
    return [
        pl.BlockSpec((t, D), lambda r, p: (r, 0)),     # x_scaled tile
        pl.BlockSpec((t, 1), lambda r, p: (r, 0)),     # x2 (col)
        pl.BlockSpec((Mp, D), lambda r, p: (0, 0)),    # z_scaled (invariant)
        pl.BlockSpec((1, Mp), lambda r, p: (0, 0)),    # z2 (invariant)
        pl.BlockSpec((Mp, Mp), lambda r, p: (0, 0)),   # C (invariant)
        pl.BlockSpec((1, Mp), lambda r, p: (0, 0)),    # v (invariant)
    ]


def _fused_rows_full(xs_pad, x2_col, z_scaled, z2_row, C_pad, v_row, params, t):
    Np, D = xs_pad.shape
    Mp = C_pad.shape[0]
    grid_spec = pltpu.PrefetchScalarGridSpec(
        num_scalar_prefetch=1,
        grid=(Np // t,),
        in_specs=_fused_in_specs(D, Mp, t),
        out_specs=(
            pl.BlockSpec((t, Mp), lambda r, p: (r, 0)),   # kxz
            pl.BlockSpec((t, Mp), lambda r, p: (r, 0)),   # ac
            pl.BlockSpec((1, t), lambda r, p: (0, r)),    # mu (lane-dense)
        ),
    )
    return pl.pallas_call(
        _fused_rows_full_kernel,
        out_shape=(jax.ShapeDtypeStruct((Np, Mp), jnp.float32),
                   jax.ShapeDtypeStruct((Np, Mp), jnp.float32),
                   jax.ShapeDtypeStruct((1, Np), jnp.float32)),
        grid_spec=grid_spec,
        compiler_params=pltpu.CompilerParams(
            dimension_semantics=("parallel",),
            vmem_limit_bytes=_VMEM_LIMIT),
    )(params, xs_pad, x2_col, z_scaled, z2_row, C_pad, v_row)


def _fused_rows_diag(xs_pad, x2_col, z_scaled, z2_row, C_pad, v_row, params, t):
    Np, D = xs_pad.shape
    Mp = C_pad.shape[0]
    grid_spec = pltpu.PrefetchScalarGridSpec(
        num_scalar_prefetch=1,
        grid=(Np // t,),
        in_specs=_fused_in_specs(D, Mp, t),
        out_specs=(
            pl.BlockSpec((1, t), lambda r, p: (0, r)),    # mu
            pl.BlockSpec((1, t), lambda r, p: (0, r)),    # var
        ),
    )
    return pl.pallas_call(
        _fused_rows_diag_kernel,
        out_shape=(jax.ShapeDtypeStruct((1, Np), jnp.float32),
                   jax.ShapeDtypeStruct((1, Np), jnp.float32)),
        grid_spec=grid_spec,
        compiler_params=pltpu.CompilerParams(
            dimension_semantics=("parallel",),
            vmem_limit_bytes=_VMEM_LIMIT),
    )(params, xs_pad, x2_col, z_scaled, z2_row, C_pad, v_row)


# ----------------------------------------------------------------------------
# Pallas kernel 3: tiled full posterior covariance
#   cov_ij = RBF(x_i, x_j) + JITTER*[global diag, only on i==j tiles]
#            + AC_i @ Kxz_j^T    (AC hoisted; transpose-free contraction)
# Kxx is fused (recomputed per tile) — never written to / read from HBM.
# ----------------------------------------------------------------------------
def _cov_tile_kernel(params_ref, xi_ref, xj_ref, xi2_ref, xj2_ref,
                     aci_ref, kxzj_ref, cov_ref):
    outputscale = params_ref[0]

    # fused Kxx tile (cross term on the MXU; norms hoisted in the wrapper)
    xx = lax.dot_general(xi_ref[...], xj_ref[...], (((1,), (1,)), ((), ())),
                         preferred_element_type=jnp.float32)          # (tm, tn)
    sq = jnp.maximum(xi2_ref[...] + xj2_ref[...] - 2.0 * xx, 0.0)
    kxx = outputscale * jnp.exp(-0.5 * sq)

    # AC_i @ Kxz_j^T without materializing any transpose in VMEM
    cov_ref[...] = kxx + lax.dot_general(aci_ref[...], kxzj_ref[...],
                                         (((1,), (1,)), ((), ())),
                                         preferred_element_type=jnp.float32)

    # jitter only on diagonal tiles (off-diagonal tiles skip the iota work)
    @pl.when(pl.program_id(0) == pl.program_id(1))
    def _():
        tm, tn = cov_ref.shape
        rl = lax.broadcasted_iota(jnp.int32, (tm, tn), 0)
        cl = lax.broadcasted_iota(jnp.int32, (tm, tn), 1)
        cov_ref[...] = cov_ref[...] + jnp.where(
            rl == cl, jnp.float32(JITTER), jnp.float32(0.0))


def _cov(xs_pad, x2_col, x2_row, ac_pad, kxz_pad, params, t):
    Np, D = xs_pad.shape
    Mp = kxz_pad.shape[1]
    g = Np // t
    grid_spec = pltpu.PrefetchScalarGridSpec(
        num_scalar_prefetch=1,
        grid=(g, g),
        in_specs=[
            pl.BlockSpec((t, D), lambda i, j, p: (i, 0)),
            pl.BlockSpec((t, D), lambda i, j, p: (j, 0)),
            pl.BlockSpec((t, 1), lambda i, j, p: (i, 0)),
            pl.BlockSpec((1, t), lambda i, j, p: (0, j)),
            pl.BlockSpec((t, Mp), lambda i, j, p: (i, 0)),   # AC rows i
            pl.BlockSpec((t, Mp), lambda i, j, p: (j, 0)),   # Kxz rows j
        ],
        out_specs=pl.BlockSpec((t, t), lambda i, j, p: (i, j)),
    )
    return pl.pallas_call(
        _cov_tile_kernel,
        out_shape=jax.ShapeDtypeStruct((Np, Np), jnp.float32),
        grid_spec=grid_spec,
        compiler_params=pltpu.CompilerParams(
            dimension_semantics=("parallel", "parallel"),
            vmem_limit_bytes=_VMEM_LIMIT),
    )(params, xs_pad, xs_pad, x2_col, x2_row, ac_pad, kxz_pad)


# ----------------------------------------------------------------------------
# Model (JAX glue around the Pallas kernels)
# ----------------------------------------------------------------------------
class SparseGaussianProcessRegression:
    def __init__(self, outputscale=1.0, lengthscale=1.0, outputsigma=1.0,
                 train_sigma=True, cov_tile=512):
        if cov_tile % 128 != 0:
            raise ValueError("cov_tile must be a multiple of 128")
        self.outputscale = float(outputscale)
        self.lengthscale = float(lengthscale)
        self.train_sigma = train_sigma
        self.cov_tile = int(cov_tile)
        self.log_outputsigma = jnp.log(jnp.asarray(outputsigma, jnp.float32))

    @property
    def outputsigma(self):
        return jnp.exp(self.log_outputsigma)

    def posterior(self, x, q, diag=False):
        x = jnp.asarray(x, jnp.float32)
        z = jnp.asarray(q["inducing_locations"], jnp.float32)       # (M, D)
        qu_loc = jnp.asarray(q["loc"], jnp.float32).reshape(-1)     # (M,)
        qu_cov = jnp.asarray(q["covariance_matrix"], jnp.float32)   # (M, M)
        N, D = x.shape
        M = z.shape[0]

        inv_ls = 1.0 / self.lengthscale
        params = jnp.array([self.outputscale], dtype=jnp.float32)

        # ---- hoisted z-side quantities, lane-dense padded to Mp (mult of 128)
        Mp = _round_up(M, 128)
        z_scaled = z * inv_ls
        zs_pad = jnp.pad(z_scaled, ((0, Mp - M), (0, 0)))
        z2 = jnp.sum(z_scaled * z_scaled, axis=-1)                   # (M,)
        # Padded columns get a huge squared distance so exp underflows to an
        # EXACT zero: padded Kxz / Kzz columns contribute nothing downstream.
        z2_row = jnp.pad(z2, (0, Mp - M), constant_values=_BIG)[None, :]
        z2_col = jnp.pad(z2, (0, Mp - M))[:, None]                   # (Mp, 1)

        # ---- Kzz via the row-tiled Pallas RBF kernel (padded part sliced off)
        kzz = _rbf_rows(zs_pad, z2_col, zs_pad, z2_row, params, 128)[:M, :M]
        kzz = kzz + JITTER * jnp.eye(M, dtype=jnp.float32)           # add_diagonal

        # ---- hoisted M x M chain via Cholesky solves (no explicit inverse).
        # TODO(synk): Cholesky factorization / triangular solves have no clean
        # Pallas equivalent; done with plain JAX linalg.
        L = jnp.linalg.cholesky(kzz)
        v = cho_solve((L, True), qu_loc)                             # Kzz^-1 m
        B = qu_cov - kzz
        C = cho_solve((L, True), cho_solve((L, True), B).T)          # Kzz^-1 B Kzz^-1
        C = 0.5 * (C + C.T)           # symmetrize away f32 round-off asymmetry
        C_pad = jnp.zeros((Mp, Mp), jnp.float32).at[:M, :M].set(C)
        v_row = jnp.pad(v, (0, Mp - M)).reshape(1, Mp)

        # ---- hoisted x-side quantities
        t = _choose_tile(N, self.cov_tile)
        Np = _round_up(N, t)
        xs_pad = jnp.pad(x * inv_ls, ((0, Np - N), (0, 0)))
        x2 = jnp.sum(xs_pad * xs_pad, axis=-1)                       # (Np,)
        x2_col = x2[:, None]
        x2_row = x2[None, :]

        if diag:
            # Single fused pass; Kxz / AC never touch HBM, no N x N cov.
            mu_p, var_p = _fused_rows_diag(xs_pad, x2_col, zs_pad, z2_row,
                                           C_pad, v_row, params, t)
            qf_mu = mu_p[0, :N]
            # NOTE: deliberate deviation from the reference — clamp at 0
            # before sqrt to guard against tiny negative f32 rounding.
            qf_var = jnp.maximum(var_p[0, :N], 0.0)
            return qf_mu, jnp.sqrt(qf_var)

        # Fused pass emits Kxz, AC = Kxz @ C (hoisted out of the cov loop), mu.
        kxz_pad, ac_pad, mu_p = _fused_rows_full(xs_pad, x2_col, zs_pad,
                                                 z2_row, C_pad, v_row,
                                                 params, t)
        qf_mu = mu_p[0, :N]
        cov_pad = _cov(xs_pad, x2_col, x2_row, ac_pad, kxz_pad, params, t)
        # MultivariateNormal(qf_mu, covariance_matrix=qf_cov)
        return qf_mu, cov_pad[:N, :N]

    def forward(self, x, q, diag=False):
        return self.posterior(x, q, diag=diag)


# ----------------------------------------------------------------------------
# Pure-JAX reference (for correctness check)
# ----------------------------------------------------------------------------
def _rbf_ref(a, b, outputscale, lengthscale):
    d = (a[:, None, :] - b[None, :, :]) / lengthscale
    return outputscale * jnp.exp(-0.5 * jnp.sum(d * d, axis=-1))


def _ref_common(x, q, outputscale, lengthscale):
    z, m, S = q["inducing_locations"], q["loc"], q["covariance_matrix"]
    M = z.shape[0]
    kxz = _rbf_ref(x, z, outputscale, lengthscale)
    kzz = _rbf_ref(z, z, outputscale, lengthscale) + JITTER * jnp.eye(M)
    L = jnp.linalg.cholesky(kzz)
    ikzz = cho_solve((L, True), jnp.eye(M, dtype=jnp.float32))
    A = kxz @ ikzz
    return kxz, kzz, A, m, S


def _posterior_ref(x, q, outputscale, lengthscale):
    N = x.shape[0]
    kxz, kzz, A, m, S = _ref_common(x, q, outputscale, lengthscale)
    kxx = _rbf_ref(x, x, outputscale, lengthscale) + JITTER * jnp.eye(N)
    mu = A @ m
    cov = kxx + A @ (S - kzz) @ A.T
    return mu, cov


def _posterior_diag_ref(x, q, outputscale, lengthscale):
    kxz, kzz, A, m, S = _ref_common(x, q, outputscale, lengthscale)
    mu = A @ m
    var = outputscale + jnp.sum((A @ (S - kzz)) * A, axis=-1)
    return mu, jnp.sqrt(var)


if __name__ == "__main__":
    key = jax.random.PRNGKey(0)
    N, M, D = 200, 16, 4   # test points, inducing points, input dim

    kx, kz, kl, kc = jax.random.split(key, 4)
    x = jax.random.normal(kx, (N, D), dtype=jnp.float32)
    # spread-out inducing locations -> well-conditioned Kzz
    z = 2.0 * jax.random.normal(kz, (M, D), dtype=jnp.float32)
    qu_loc = jax.random.normal(kl, (M,), dtype=jnp.float32)
    Lq = jax.random.normal(kc, (M, M), dtype=jnp.float32) * 0.1
    qu_cov = Lq @ Lq.T + 0.5 * jnp.eye(M, dtype=jnp.float32)   # PSD q(u) covariance

    q = {"inducing_locations": z, "loc": qu_loc, "covariance_matrix": qu_cov}

    # cov_tile=128 so N=200 -> padded 256 exercises the 2x2 tiled grid and the
    # pl.when(i==j) jitter gating; M=16 -> Mp=128 exercises column padding.
    model = SparseGaussianProcessRegression(outputscale=1.0, lengthscale=1.0,
                                            outputsigma=1.0, cov_tile=128)

    qf_mu, qf_cov = model.forward(x, q, diag=False)
    qf_mu = jax.block_until_ready(qf_mu)
    qf_cov = jax.block_until_ready(qf_cov)
    assert qf_mu.shape == (N,) and qf_cov.shape == (N, N)

    ref_mu, ref_cov = _posterior_ref(x, q, 1.0, 1.0)
    assert jnp.allclose(qf_mu, ref_mu, rtol=1e-4, atol=1e-4), "mu mismatch"
    assert jnp.allclose(qf_cov, ref_cov, rtol=1e-4, atol=1e-4), "cov mismatch"

    # diag=True branch (never materializes the N x N covariance)
    d_mu, d_std = model.forward(x, q, diag=True)
    d_mu = jax.block_until_ready(d_mu)
    d_std = jax.block_until_ready(d_std)
    ref_dmu, ref_dstd = _posterior_diag_ref(x, q, 1.0, 1.0)
    assert jnp.allclose(d_mu, ref_dmu, rtol=1e-4, atol=1e-4), "diag mu mismatch"
    assert jnp.allclose(d_std, ref_dstd, rtol=1e-4, atol=1e-4), "diag std mismatch"

    print("KERNEL_OK")
</pallas_src>

<mosaic_0001>
module attributes {stable_mosaic.version = 11 : i64} {
  func.func @_rbf_rows_kernel(%arg0: i32, %arg1: memref<1xf32, #tpu.memory_space<smem>>, %arg2: memref<128x4xf32, #tpu.memory_space<vmem>>, %arg3: memref<128x1xf32, #tpu.memory_space<vmem>>, %arg4: memref<128x4xf32, #tpu.memory_space<vmem>>, %arg5: memref<1x128xf32, #tpu.memory_space<vmem>>, %arg6: memref<128x128xf32, #tpu.memory_space<vmem>>) attributes {dimension_semantics = [#tpu.dimension_semantics<parallel>], iteration_bounds = array<i64: 1>, scalar_prefetch = 1 : i64, scratch_operands = 0 : i64, tpu.core_type = #tpu.core_type<tc>, window_params = [{transform_indices = @transform_0, window_bounds = array<i64: 128, 4>}, {transform_indices = @transform_1, window_bounds = array<i64: 128, 1>}, {pipeline_mode = #tpu.pipeline_mode<synchronous>, transform_indices = @transform_2, window_bounds = array<i64: 128, 4>}, {pipeline_mode = #tpu.pipeline_mode<synchronous>, transform_indices = @transform_3, window_bounds = array<i64: 1, 128>}, {transform_indices = @transform_4, window_bounds = array<i64: 128, 128>}]} {
    %c0 = arith.constant 0 : index
    %0 = memref.load %arg1[%c0] : memref<1xf32, #tpu.memory_space<smem>>
    %c0_0 = arith.constant 0 : index
    %c0_1 = arith.constant 0 : index
    %1 = vector.load %arg2[%c0_0, %c0_1] : memref<128x4xf32, #tpu.memory_space<vmem>>, vector<128x4xf32>
    %c0_2 = arith.constant 0 : index
    %c0_3 = arith.constant 0 : index
    %2 = vector.load %arg4[%c0_2, %c0_3] : memref<128x4xf32, #tpu.memory_space<vmem>>, vector<128x4xf32>
    %cst = arith.constant dense<0.000000e+00> : vector<128x128xf32>
    %3 = tpu.matmul %1, %2, %cst {dimension_numbers = #tpu.dot_dimension_numbers<[1], [1], [0], [0], [0, 0, 1, 0], [], []>} : vector<128x4xf32>, vector<128x4xf32>, vector<128x128xf32> -> vector<128x128xf32>
    %c0_4 = arith.constant 0 : index
    %c0_5 = arith.constant 0 : index
    %4 = vector.load %arg3[%c0_4, %c0_5] : memref<128x1xf32, #tpu.memory_space<vmem>>, vector<128x1xf32>
    %c0_6 = arith.constant 0 : index
    %c0_7 = arith.constant 0 : index
    %5 = vector.load %arg5[%c0_6, %c0_7] : memref<1x128xf32, #tpu.memory_space<vmem>>, vector<1x128xf32>
    %6 = vector.broadcast %4 : vector<128x1xf32> to vector<128x128xf32>
    %7 = vector.broadcast %5 : vector<1x128xf32> to vector<128x128xf32>
    %8 = arith.addf %6, %7 : vector<128x128xf32>
    %cst_8 = arith.constant 2.000000e+00 : f32
    %9 = vector.broadcast %cst_8 : f32 to vector<128x128xf32>
    %10 = arith.mulf %9, %3 : vector<128x128xf32>
    %11 = arith.subf %8, %10 : vector<128x128xf32>
    %cst_9 = arith.constant 0.000000e+00 : f32
    %12 = vector.broadcast %cst_9 : f32 to vector<128x128xf32>
    %13 = arith.maximumf %11, %12 : vector<128x128xf32>
    %cst_10 = arith.constant -5.000000e-01 : f32
    %14 = vector.broadcast %cst_10 : f32 to vector<128x128xf32>
    %15 = arith.mulf %14, %13 : vector<128x128xf32>
    %16 = math.exp %15 : vector<128x128xf32>
    %17 = vector.broadcast %0 : f32 to vector<128x128xf32>
    %18 = arith.mulf %17, %16 : vector<128x128xf32>
    %c0_11 = arith.constant 0 : index
    %c0_12 = arith.constant 0 : index
    %19 = vector.load %arg6[%c0_11, %c0_12] : memref<128x128xf32, #tpu.memory_space<vmem>>, vector<128x128xf32>
    tpu.vector_store %arg6[%c0_11, %c0_12], %18 {strides = array<i32>} : memref<128x128xf32, #tpu.memory_space<vmem>>, vector<128x128xf32>,
    return
  }
  func.func @transform_0(%arg0: i32, %arg1: memref<1xf32, #tpu.memory_space<smem>>) -> (i32, i32) {
    %c0_i32 = arith.constant 0 : i32
    %c0_i32_0 = arith.constant 0 : i32
    return %arg0, %c0_i32 : i32, i32
  }
  func.func @transform_1(%arg0: i32, %arg1: memref<1xf32, #tpu.memory_space<smem>>) -> (i32, i32) {
    %c0_i32 = arith.constant 0 : i32
    %c0_i32_0 = arith.constant 0 : i32
    return %arg0, %c0_i32 : i32, i32
  }
  func.func @transform_2(%arg0: i32, %arg1: memref<1xf32, #tpu.memory_space<smem>>) -> (i32, i32) {
    %c0_i32 = arith.constant 0 : i32
    %c0_i32_0 = arith.constant 0 : i32
    %c0_i32_1 = arith.constant 0 : i32
    return %c0_i32, %c0_i32_0 : i32, i32
  }
  func.func @transform_3(%arg0: i32, %arg1: memref<1xf32, #tpu.memory_space<smem>>) -> (i32, i32) {
    %c0_i32 = arith.constant 0 : i32
    %c0_i32_0 = arith.constant 0 : i32
    %c0_i32_1 = arith.constant 0 : i32
    return %c0_i32, %c0_i32_0 : i32, i32
  }
  func.func @transform_4(%arg0: i32, %arg1: memref<1xf32, #tpu.memory_space<smem>>) -> (i32, i32) {
    %c0_i32 = arith.constant 0 : i32
    %c0_i32_0 = arith.constant 0 : i32
    return %arg0, %c0_i32 : i32, i32
  }
}

</mosaic_0001>

<llo_original>
// kernel: tpu_custom_call.1
$region0: #{tpu_custom_call.1}
  #allocation0 [shape = 'u32[]', space=smem, size = 0x4, offset = 0x4, fixed_abs, tag = 'smem constant byte address 0x4 - core index']
  #allocation1 [shape = 'u32[144,128]{1,0:T(1,128)}', space=vmem, size = 0x12000, scoped, tag = 'internal scratch']
  #allocation2 [shape = 's32[1]{0}', space=sflag, size = 0x4, scoped, tag = 'scoped memory for tpu_custom_call.1']
  #allocation3 [shape = 'f32[1]{0:T(128)S(6)}', space=smem, size = 0x200, scoped, tag = 'prefetched SMEM operand 0']
  %s0 = inlined_call_operand.<no memory space> [shape: f32[1], index: 0, kind: input, shape index: {}]
  %s1 = inlined_call_operand.vmem [shape: f32[128,4], index: 1, kind: input, shape index: {}]
  %s2 = inlined_call_operand.vmem [shape: f32[128,1], index: 2, kind: input, shape index: {}]
  %s3 = inlined_call_operand.vmem [shape: f32[128,4], index: 3, kind: input, shape index: {}]
  %s4 = inlined_call_operand.vmem [shape: f32[1,128], index: 4, kind: input, shape index: {}]
  %s5 = inlined_call_operand.hbm [shape: f32[128,128], index: 5, kind: output, shape index: {}]
  %s6 = sld [smem:[#allocation0]]
  $region26: #{tpu_custom_call.1} parent=0
    _
  %s8 = ssub.s32 1, %s6
  %s9 = scalar_select 0, %s8, %s6
  %10 = sst [smem:[#allocation3]] %s0
  $region1: #{tpu_custom_call.1} parent=0
    #allocation4 [shape = 'u8[65536]{0}', space=vmem, size = 0x10000, scoped, tag = 'output window, operand 0, single buffered']
    #allocation5 [shape = 's32[1]{0}', space=sflag, size = 0x4, scoped, tag = 'scoped memory for tpu_custom_call.1']
    %11 = vsyncpa [#allocation5], 0
    // Predicated region
    $region2: #{tpu_custom_call.1} parent=1 // pred_check
      _
    $region3: #{tpu_custom_call.1} parent=1 // pred_check_branch
      %13 = sbr.rel (0) target = $region5
    $region4: #{tpu_custom_call.1} parent=1 // pred_region
      _
    $region5: #{tpu_custom_call.1} parent=1 // pred_fallthru
      _
    // Predicated region
    $region6: #{tpu_custom_call.1} parent=1 // pred_check
      _
    $region7: #{tpu_custom_call.1} parent=1 // pred_check_branch
      %15 = sbr.rel (0) target = $region9
    $region8: #{tpu_custom_call.1} parent=1 // pred_region
      _
    $region9: #{tpu_custom_call.1} parent=1 // pred_fallthru
      _
    // Predicated region
    $region10: #{tpu_custom_call.1} parent=1 // pred_check
      _
    $region11: #{tpu_custom_call.1} parent=1 // pred_check_branch
      %17 = sbr.rel (0) target = $region13
    $region12: #{tpu_custom_call.1} parent=1 // pred_region
      _
    $region13: #{tpu_custom_call.1} parent=1 // pred_fallthru
      _
    // Predicated region
    $region14: #{tpu_custom_call.1} parent=1 // pred_check
      _
    $region15: #{tpu_custom_call.1} parent=1 // pred_check_branch
      %19 = sbr.rel (0) target = $region17
    $region16: #{tpu_custom_call.1} parent=1 // pred_region
      _
    $region17: #{tpu_custom_call.1} parent=1 // pred_fallthru
      _
    %s20 = sld [smem:[#allocation3]]
    %v21 = vld [vmem:[%s1] sm:$0xff]
    %v22 = vld [vmem:[%s1 + $0x8] sm:$0xff]
    %v23 = vld [vmem:[%s1 + $0x10] sm:$0xff]
    %v24 = vld [vmem:[%s1 + $0x18] sm:$0xff]
    %v25 = vld [vmem:[%s1 + $0x20] sm:$0xff]
    %v26 = vld [vmem:[%s1 + $0x28] sm:$0xff]
    %v27 = vld [vmem:[%s1 + $0x30] sm:$0xff]
    %v28 = vld [vmem:[%s1 + $0x38] sm:$0xff]
    %v29 = vld [vmem:[%s1 + $0x40] sm:$0xff]
    %v30 = vld [vmem:[%s1 + $0x48] sm:$0xff]
    %v31 = vld [vmem:[%s1 + $0x50] sm:$0xff]
    %v32 = vld [vmem:[%s1 + $0x58] sm:$0xff]
    %v33 = vld [vmem:[%s1 + $0x60] sm:$0xff]
    %v34 = vld [vmem:[%s1 + $0x68] sm:$0xff]
    %v35 = vld [vmem:[%s1 + $0x70] sm:$0xff]
    %v36 = vld [vmem:[%s1 + $0x78] sm:$0xff]
    %v37 = vld [vmem:[%s3] sm:$0xff]
    %v38 = vld [vmem:[%s3 + $0x8] sm:$0xff]
    %v39 = vld [vmem:[%s3 + $0x10] sm:$0xff]
    %v40 = vld [vmem:[%s3 + $0x18] sm:$0xff]
    %v41 = vld [vmem:[%s3 + $0x20] sm:$0xff]
    %v42 = vld [vmem:[%s3 + $0x28] sm:$0xff]
    %v43 = vld [vmem:[%s3 + $0x30] sm:$0xff]
    %v44 = vld [vmem:[%s3 + $0x38] sm:$0xff]
    %v45 = vld [vmem:[%s3 + $0x40] sm:$0xff]
    %v46 = vld [vmem:[%s3 + $0x48] sm:$0xff]
    %v47 = vld [vmem:[%s3 + $0x50] sm:$0xff]
    %v48 = vld [vmem:[%s3 + $0x58] sm:$0xff]
    %v49 = vld [vmem:[%s3 + $0x60] sm:$0xff]
    %v50 = vld [vmem:[%s3 + $0x68] sm:$0xff]
    %v51 = vld [vmem:[%s3 + $0x70] sm:$0xff]
    %v52 = vld [vmem:[%s3 + $0x78] sm:$0xff]
    %vm53 = vcmask 31744
    %v55 = vsel %vm53, %v21, 0
    %v58 = vsel %vm53, %v22, 0
    %v61 = vsel %vm53, %v23, 0
    %v64 = vsel %vm53, %v24, 0
    %v67 = vsel %vm53, %v25, 0
    %v70 = vsel %vm53, %v26, 0
    %v73 = vsel %vm53, %v27, 0
    %v76 = vsel %vm53, %v28, 0
    %v79 = vsel %vm53, %v29, 0
    %v82 = vsel %vm53, %v30, 0
    %v85 = vsel %vm53, %v31, 0
    %v88 = vsel %vm53, %v32, 0
    %v91 = vsel %vm53, %v33, 0
    %v94 = vsel %vm53, %v34, 0
    %v97 = vsel %vm53, %v35, 0
    %v100 = vsel %vm53, %v36, 0
    %v103 = vsel %vm53, %v37, 0
    %v106 = vsel %vm53, %v38, 0
    %v109 = vsel %vm53, %v39, 0
    %v112 = vsel %vm53, %v40, 0
    %v115 = vsel %vm53, %v41, 0
    %v118 = vsel %vm53, %v42, 0
    %v121 = vsel %vm53, %v43, 0
    %v124 = vsel %vm53, %v44, 0
    %v127 = vsel %vm53, %v45, 0
    %v130 = vsel %vm53, %v46, 0
    %v133 = vsel %vm53, %v47, 0
    %v136 = vsel %vm53, %v48, 0
    %v139 = vsel %vm53, %v49, 0
    %v142 = vsel %vm53, %v50, 0
    %v145 = vsel %vm53, %v51, 0
    %v148 = vsel %vm53, %v52, 0
    %150 = vmatprep.subr.mxu0 0.0
    %151 = vmatpush1.xpose.msra.mxu0 %v103
    %152 = vmatprep.subr.mxu0 0.0
    %153 = vmatpush1.xpose.msra.mxu0 %v106
    %154 = vmatprep.subr.mxu0 0.0
    %155 = vmatpush1.xpose.msra.mxu0 %v109
    %156 = vmatprep.subr.mxu0 0.0
    %157 = vmatpush1.xpose.msra.mxu0 %v112
    %158 = vmatprep.subr.mxu0 0.0
    %159 = vmatpush1.xpose.msra.mxu0 %v115
    %160 = vmatprep.subr.mxu0 0.0
    %161 = vmatpush1.xpose.msra.mxu0 %v118
    %162 = vmatprep.subr.mxu0 0.0
    %163 = vmatpush1.xpose.msra.mxu0 %v121
    %164 = vmatprep.subr.mxu0 0.0
    %165 = vmatpush1.xpose.msra.mxu0 %v124
    %166 = vmatprep.subr.mxu0 0.0
    %167 = vmatpush1.xpose.msra.mxu0 %v127
    %168 = vmatprep.subr.mxu0 0.0
    %169 = vmatpush1.xpose.msra.mxu0 %v130
    %170 = vmatprep.subr.mxu0 0.0
    %171 = vmatpush1.xpose.msra.mxu0 %v133
    %172 = vmatprep.subr.mxu0 0.0
    %173 = vmatpush1.xpose.msra.mxu0 %v136
    %174 = vmatprep.subr.mxu0 0.0
    %175 = vmatpush1.xpose.msra.mxu0 %v139
    %176 = vmatprep.subr.mxu0 0.0
    %177 = vmatpush1.xpose.msra.mxu0 %v142
    %178 = vmatprep.subr.mxu0 0.0
    %179 = vmatpush1.xpose.msra.mxu0 %v145
    %180 = vmatprep.subr.mxu0 0.0
    %181 = vmatpush1.xpose.msra.mxu0 %v148
    %182 = vmatprep.subr.mxu0 0.0
    %183 = vmatpush1.xpose.msra.mxu0 0.0
    %184 = vmatprep.subr.mxu0 0.0
    %185 = vmatpush1.xpose.msra.mxu0 0.0
    %186 = vmatprep.subr.mxu0 0.0
    %187 = vmatpush1.xpose.msra.mxu0 0.0
    %188 = vmatprep.subr.mxu0 0.0
    %189 = vmatpush1.xpose.msra.mxu0 0.0
    %190 = vmatprep.subr.mxu0 0.0
    %191 = vmatpush1.xpose.msra.mxu0 0.0
    %192 = vmatprep.subr.mxu0 0.0
    %193 = vmatpush1.xpose.msra.mxu0 0.0
    %194 = vmatprep.subr.mxu0 0.0
    %195 = vmatpush1.xpose.msra.mxu0 0.0
    %196 = vmatprep.subr.mxu0 0.0
    %197 = vmatpush1.xpose.msra.mxu0 0.0
    %198 = vmatprep.subr.mxu0 0.0
    %199 = vmatpush1.xpose.msra.mxu0 0.0
    %200 = vmatprep.subr.mxu0 0.0
    %201 = vmatpush1.xpose.msra.mxu0 0.0
    %202 = vmatprep.subr.mxu0 0.0
    %203 = vmatpush1.xpose.msra.mxu0 0.0
    %204 = vmatprep.subr.mxu0 0.0
    %205 = vmatpush1.xpose.msra.mxu0 0.0
    %206 = vmatprep.subr.mxu0 0.0
    %207 = vmatpush1.xpose.msra.mxu0 0.0
    %208 = vmatprep.subr.mxu0 0.0
    %209 = vmatpush1.xpose.msra.mxu0 0.0
    %210 = vmatprep.subr.mxu0 0.0
    %211 = vmatpush1.xpose.msra.mxu0 0.0
    %212 = vmatprep.subr.mxu0 0.0
    %213 = vmatpush1.xpose.msra.mxu0 0.0
    %214 = vmatprep.mubr.f32.mxu0 0.0
    %215 = vmatmul.mubr.f32.gmra.mrb[0].mxu0 %v55
    %v216 = vpop.f32.mrb[0].mxu0
    %v217 = vadd.f32 0.0, %v216
    %v218 = vpop.f32.mrb[0].mxu0
    %219 = vmatprep.mubr.f32.mxu0 0.0
    %220 = vmatmul.mubr.f32.gmra.mrb[0].mxu0 %v58
    %v221 = vpop.f32.mrb[0].mxu0
    %v222 = vadd.f32 0.0, %v221
    %v223 = vpop.f32.mrb[0].mxu0
    %224 = vmatprep.mubr.f32.mxu0 0.0
    %225 = vmatmul.mubr.f32.gmra.mrb[0].mxu0 %v61
    %v226 = vpop.f32.mrb[0].mxu0
    %v227 = vadd.f32 0.0, %v226
    %v228 = vpop.f32.mrb[0].mxu0
    %229 = vmatprep.mubr.f32.mxu0 0.0
    %230 = vmatmul.mubr.f32.gmra.mrb[0].mxu0 %v64
    %v231 = vpop.f32.mrb[0].mxu0
    %v232 = vadd.f32 0.0, %v231
    %v233 = vpop.f32.mrb[0].mxu0
    %234 = vmatprep.mubr.f32.mxu0 0.0
    %235 = vmatmul.mubr.f32.gmra.mrb[0].mxu0 %v67
    %v236 = vpop.f32.mrb[0].mxu0
    %v237 = vadd.f32 0.0, %v236
    %v238 = vpop.f32.mrb[0].mxu0
    %239 = vmatprep.mubr.f32.mxu0 0.0
    %240 = vmatmul.mubr.f32.gmra.mrb[0].mxu0 %v70
    %v241 = vpop.f32.mrb[0].mxu0
    %v242 = vadd.f32 0.0, %v241
    %v243 = vpop.f32.mrb[0].mxu0
    %244 = vmatprep.mubr.f32.mxu0 0.0
    %245 = vmatmul.mubr.f32.gmra.mrb[0].mxu0 %v73
    %v246 = vpop.f32.mrb[0].mxu0
    %v247 = vadd.f32 0.0, %v246
    %v248 = vpop.f32.mrb[0].mxu0
    %249 = vmatprep.mubr.f32.mxu0 0.0
    %250 = vmatmul.mubr.f32.gmra.mrb[0].mxu0 %v76
    %v251 = vpop.f32.mrb[0].mxu0
    %v252 = vadd.f32 0.0, %v251
    %v253 = vpop.f32.mrb[0].mxu0
    %254 = vmatprep.mubr.f32.mxu0 0.0
    %255 = vmatmul.mubr.f32.gmra.mrb[0].mxu0 %v79
    %v256 = vpop.f32.mrb[0].mxu0
    %v257 = vadd.f32 0.0, %v256
    %v258 = vpop.f32.mrb[0].mxu0
    %259 = vmatprep.mubr.f32.mxu0 0.0
    %260 = vmatmul.mubr.f32.gmra.mrb[0].mxu0 %v82
    %v261 = vpop.f32.mrb[0].mxu0
    %v262 = vadd.f32 0.0, %v261
    %v263 = vpop.f32.mrb[0].mxu0
    %264 = vmatprep.mubr.f32.mxu0 0.0
    %265 = vmatmul.mubr.f32.gmra.mrb[0].mxu0 %v85
    %v266 = vpop.f32.mrb[0].mxu0
    %v267 = vadd.f32 0.0, %v266
    %v268 = vpop.f32.mrb[0].mxu0
    %269 = vmatprep.mubr.f32.mxu0 0.0
    %270 = vmatmul.mubr.f32.gmra.mrb[0].mxu0 %v88
    %v271 = vpop.f32.mrb[0].mxu0
    %v272 = vadd.f32 0.0, %v271
    %v273 = vpop.f32.mrb[0].mxu0
    %274 = vmatprep.mubr.f32.mxu0 0.0
    %275 = vmatmul.mubr.f32.gmra.mrb[0].mxu0 %v91
    %v276 = vpop.f32.mrb[0].mxu0
    %v277 = vadd.f32 0.0, %v276
    %v278 = vpop.f32.mrb[0].mxu0
    %279 = vmatprep.mubr.f32.mxu0 0.0
    %280 = vmatmul.mubr.f32.gmra.mrb[0].mxu0 %v94
    %v281 = vpop.f32.mrb[0].mxu0
    %v282 = vadd.f32 0.0, %v281
    %v283 = vpop.f32.mrb[0].mxu0
    %284 = vmatprep.mubr.f32.mxu0 0.0
    %285 = vmatmul.mubr.f32.gmra.mrb[0].mxu0 %v97
    %v286 = vpop.f32.mrb[0].mxu0
    %v287 = vadd.f32 0.0, %v286
    %v288 = vpop.f32.mrb[0].mxu0
    %289 = vmatprep.mubr.f32.mxu0 0.0
    %290 = vmatmul.mubr.f32.gmra.mrb[0].mxu0 %v100
    %v291 = vpop.f32.mrb[0].mxu0
    %v292 = vadd.f32 0.0, %v291
    %v293 = vpop.f32.mrb[0].mxu0
    %294 = vdwg.mxu0
    %v295 = vld [vmem:[%s2] sm:$0xff]
    %v296 = vld [vmem:[%s2 + $0x8] sm:$0xff]
    %v297 = vld [vmem:[%s2 + $0x10] sm:$0xff]
    %v298 = vld [vmem:[%s2 + $0x18] sm:$0xff]
    %v299 = vld [vmem:[%s2 + $0x20] sm:$0xff]
    %v300 = vld [vmem:[%s2 + $0x28] sm:$0xff]
    %v301 = vld [vmem:[%s2 + $0x30] sm:$0xff]
    %v302 = vld [vmem:[%s2 + $0x38] sm:$0xff]
    %v303 = vld [vmem:[%s2 + $0x40] sm:$0xff]
    %v304 = vld [vmem:[%s2 + $0x48] sm:$0xff]
    %v305 = vld [vmem:[%s2 + $0x50] sm:$0xff]
    %v306 = vld [vmem:[%s2 + $0x58] sm:$0xff]
    %v307 = vld [vmem:[%s2 + $0x60] sm:$0xff]
    %v308 = vld [vmem:[%s2 + $0x68] sm:$0xff]
    %v309 = vld [vmem:[%s2 + $0x70] sm:$0xff]
    %v310 = vld [vmem:[%s2 + $0x78] sm:$0xff]
    %v311 = vld [vmem:[%s4] sm:$0x1]
    %313 = vset.pattern.permute.xlu0 0
    %314 = vperm.xlu0 %313, %v295
    %v315 = vpop.permute.xlu0 %314
    %318 = vset.pattern.permute.xlu0 0
    %319 = vperm.xlu0 %318, %v296
    %v320 = vpop.permute.xlu0 %319
    %323 = vset.pattern.permute.xlu0 0
    %324 = vperm.xlu0 %323, %v297
    %v325 = vpop.permute.xlu0 %324
    %328 = vset.pattern.permute.xlu0 0
    %329 = vperm.xlu0 %328, %v298
    %v330 = vpop.permute.xlu0 %329
    %333 = vset.pattern.permute.xlu0 0
    %334 = vperm.xlu0 %333, %v299
    %v335 = vpop.permute.xlu0 %334
    %338 = vset.pattern.permute.xlu0 0
    %339 = vperm.xlu0 %338, %v300
    %v340 = vpop.permute.xlu0 %339
    %343 = vset.pattern.permute.xlu0 0
    %344 = vperm.xlu0 %343, %v301
    %v345 = vpop.permute.xlu0 %344
    %348 = vset.pattern.permute.xlu0 0
    %349 = vperm.xlu0 %348, %v302
    %v350 = vpop.permute.xlu0 %349
    %353 = vset.pattern.permute.xlu0 0
    %354 = vperm.xlu0 %353, %v303
    %v355 = vpop.permute.xlu0 %354
    %358 = vset.pattern.permute.xlu0 0
    %359 = vperm.xlu0 %358, %v304
    %v360 = vpop.permute.xlu0 %359
    %363 = vset.pattern.permute.xlu0 0
    %364 = vperm.xlu0 %363, %v305
    %v365 = vpop.permute.xlu0 %364
    %368 = vset.pattern.permute.xlu0 0
    %369 = vperm.xlu0 %368, %v306
    %v370 = vpop.permute.xlu0 %369
    %373 = vset.pattern.permute.xlu0 0
    %374 = vperm.xlu0 %373, %v307
    %v375 = vpop.permute.xlu0 %374
    %378 = vset.pattern.permute.xlu0 0
    %379 = vperm.xlu0 %378, %v308
    %v380 = vpop.permute.xlu0 %379
    %383 = vset.pattern.permute.xlu0 0
    %384 = vperm.xlu0 %383, %v309
    %v385 = vpop.permute.xlu0 %384
    %388 = vset.pattern.permute.xlu0 0
    %389 = vperm.xlu0 %388, %v310
    %v390 = vpop.permute.xlu0 %389
    %v393 = vlaneseq
    %v394 = vshrl.u32 %v393, 7
    %v395 = vsub.s32 0, %v394
    %v396 = vrot.slane %v311, %v395
    %v398 = vadd.f32 %v315, %v396
    %v399 = vadd.f32 %v320, %v396
    %v400 = vadd.f32 %v325, %v396
    %v401 = vadd.f32 %v330, %v396
    %v402 = vadd.f32 %v335, %v396
    %v403 = vadd.f32 %v340, %v396
    %v404 = vadd.f32 %v345, %v396
    %v405 = vadd.f32 %v350, %v396
    %v406 = vadd.f32 %v355, %v396
    %v407 = vadd.f32 %v360, %v396
    %v408 = vadd.f32 %v365, %v396
    %v409 = vadd.f32 %v370, %v396
    %v410 = vadd.f32 %v375, %v396
    %v411 = vadd.f32 %v380, %v396
    %v412 = vadd.f32 %v385, %v396
    %v413 = vadd.f32 %v390, %v396
    %v414 = vmul.f32 %v217, 2.0
    %v415 = vmul.f32 %v222, 2.0
    %v416 = vmul.f32 %v227, 2.0
    %v417 = vmul.f32 %v232, 2.0
    %v418 = vmul.f32 %v237, 2.0
    %v419 = vmul.f32 %v242, 2.0
    %v420 = vmul.f32 %v247, 2.0
    %v421 = vmul.f32 %v252, 2.0
    %v422 = vmul.f32 %v257, 2.0
    %v423 = vmul.f32 %v262, 2.0
    %v424 = vmul.f32 %v267, 2.0
    %v425 = vmul.f32 %v272, 2.0
    %v426 = vmul.f32 %v277, 2.0
    %v427 = vmul.f32 %v282, 2.0
    %v428 = vmul.f32 %v287, 2.0
    %v429 = vmul.f32 %v292, 2.0
    %v430 = vsub.f32 %v398, %v414
    %v431 = vsub.f32 %v399, %v415
    %v432 = vsub.f32 %v400, %v416
    %v433 = vsub.f32 %v401, %v417
    %v434 = vsub.f32 %v402, %v418
    %v435 = vsub.f32 %v403, %v419
    %v436 = vsub.f32 %v404, %v420
    %v437 = vsub.f32 %v405, %v421
    %v438 = vsub.f32 %v406, %v422
    %v439 = vsub.f32 %v407, %v423
    %v440 = vsub.f32 %v408, %v424
    %v441 = vsub.f32 %v409, %v425
    %v442 = vsub.f32 %v410, %v426
    %v443 = vsub.f32 %v411, %v427
    %v444 = vsub.f32 %v412, %v428
    %v445 = vsub.f32 %v413, %v429
    %v446 = vmax.f32 %v430, 0.0
    %v447 = vmax.f32 %v431, 0.0
    %v448 = vmax.f32 %v432, 0.0
    %v449 = vmax.f32 %v433, 0.0
    %v450 = vmax.f32 %v434, 0.0
    %v451 = vmax.f32 %v435, 0.0
    %v452 = vmax.f32 %v436, 0.0
    %v453 = vmax.f32 %v437, 0.0
    %v454 = vmax.f32 %v438, 0.0
    %v455 = vmax.f32 %v439, 0.0
    %v456 = vmax.f32 %v440, 0.0
    %v457 = vmax.f32 %v441, 0.0
    %v458 = vmax.f32 %v442, 0.0
    %v459 = vmax.f32 %v443, 0.0
    %v460 = vmax.f32 %v444, 0.0
    %v461 = vmax.f32 %v445, 0.0
    %v462 = vmul.f32 %v446, -0.5
    %v463 = vmul.f32 %v447, -0.5
    %v464 = vmul.f32 %v448, -0.5
    %v465 = vmul.f32 %v449, -0.5
    %v466 = vmul.f32 %v450, -0.5
    %v467 = vmul.f32 %v451, -0.5
    %v468 = vmul.f32 %v452, -0.5
    %v469 = vmul.f32 %v453, -0.5
    %v470 = vmul.f32 %v454, -0.5
    %v471 = vmul.f32 %v455, -0.5
    %v472 = vmul.f32 %v456, -0.5
    %v473 = vmul.f32 %v457, -0.5
    %v474 = vmul.f32 %v458, -0.5
    %v475 = vmul.f32 %v459, -0.5
    %v476 = vmul.f32 %v460, -0.5
    %v477 = vmul.f32 %v461, -0.5
    %v478 = vmul.f32 %v462, 1.442695
    %v479 = vpow.pop %v478
    %v480 = vmul.f32 %v463, 1.442695
    %v481 = vpow.pop %v480
    %v482 = vmul.f32 %v464, 1.442695
    %v483 = vpow.pop %v482
    %v484 = vmul.f32 %v465, 1.442695
    %v485 = vpow.pop %v484
    %v486 = vmul.f32 %v466, 1.442695
    %v487 = vpow.pop %v486
    %v488 = vmul.f32 %v467, 1.442695
    %v489 = vpow.pop %v488
    %v490 = vmul.f32 %v468, 1.442695
    %v491 = vpow.pop %v490
    %v492 = vmul.f32 %v469, 1.442695
    %v493 = vpow.pop %v492
    %v494 = vmul.f32 %v470, 1.442695
    %v495 = vpow.pop %v494
    %v496 = vmul.f32 %v471, 1.442695
    %v497 = vpow.pop %v496
    %v498 = vmul.f32 %v472, 1.442695
    %v499 = vpow.pop %v498
    %v500 = vmul.f32 %v473, 1.442695
    %v501 = vpow.pop %v500
    %v502 = vmul.f32 %v474, 1.442695
    %v503 = vpow.pop %v502
    %v504 = vmul.f32 %v475, 1.442695
    %v505 = vpow.pop %v504
    %v506 = vmul.f32 %v476, 1.442695
    %v507 = vpow.pop %v506
    %v508 = vmul.f32 %v477, 1.442695
    %v509 = vpow.pop %v508
    %v510 = vstv %s20
    %v511 = vmul.f32 %v510, %v479
    %v512 = vmul.f32 %v510, %v481
    %v513 = vmul.f32 %v510, %v483
    %v514 = vmul.f32 %v510, %v485
    %v515 = vmul.f32 %v510, %v487
    %v516 = vmul.f32 %v510, %v489
    %v517 = vmul.f32 %v510, %v491
    %v518 = vmul.f32 %v510, %v493
    %v519 = vmul.f32 %v510, %v495
    %v520 = vmul.f32 %v510, %v497
    %v521 = vmul.f32 %v510, %v499
    %v522 = vmul.f32 %v510, %v501
    %v523 = vmul.f32 %v510, %v503
    %v524 = vmul.f32 %v510, %v505
    %v525 = vmul.f32 %v510, %v507
    %v526 = vmul.f32 %v510, %v509
    %527 = vst [vmem:[#allocation4] sm:$0xff] %v511
    %528 = vst [vmem:[#allocation4 + $0x8] sm:$0xff] %v512
    %529 = vst [vmem:[#allocation4 + $0x10] sm:$0xff] %v513
    %530 = vst [vmem:[#allocation4 + $0x18] sm:$0xff] %v514
    %531 = vst [vmem:[#allocation4 + $0x20] sm:$0xff] %v515
    %532 = vst [vmem:[#allocation4 + $0x28] sm:$0xff] %v516
    %533 = vst [vmem:[#allocation4 + $0x30] sm:$0xff] %v517
    %534 = vst [vmem:[#allocation4 + $0x38] sm:$0xff] %v518
    %535 = vst [vmem:[#allocation4 + $0x40] sm:$0xff] %v519
    %536 = vst [vmem:[#allocation4 + $0x48] sm:$0xff] %v520
    %537 = vst [vmem:[#allocation4 + $0x50] sm:$0xff] %v521
    %538 = vst [vmem:[#allocation4 + $0x58] sm:$0xff] %v522
    %539 = vst [vmem:[#allocation4 + $0x60] sm:$0xff] %v523
    %540 = vst [vmem:[#allocation4 + $0x68] sm:$0xff] %v524
    %541 = vst [vmem:[#allocation4 + $0x70] sm:$0xff] %v525
    %542 = vst [vmem:[#allocation4 + $0x78] sm:$0xff] %v526
    // Predicated region
    $region18: #{tpu_custom_call.1} parent=1 // pred_check
      _
    $region19: #{tpu_custom_call.1} parent=1 // pred_check_branch
      %544 = sbr.rel (0) target = $region21
    $region20: #{tpu_custom_call.1} parent=1 // pred_region
      %s546 = ssub.s32 2048, 2048
      %547 = vsyncadd [#allocation5], %s546
      %s548 = sshll.u32 [#allocation4], 4
      %s549 = int_to_ptr.vmem [resolvable:$true] %s548
      %554 = dma.vmem_to_hbm [thread:$0]  %s549, 2048, %s5, [#allocation5], 128, 128, 8
    $region21: #{tpu_custom_call.1} parent=1 // pred_fallthru
      _
    // Predicated region
    $region22: #{tpu_custom_call.1} parent=1 // pred_check
      _
    $region23: #{tpu_custom_call.1} parent=1 // pred_check_branch
      %556 = sbr.rel (0) target = $region25
    $region24: #{tpu_custom_call.1} parent=1 // pred_region
      %557 = dma.done [#allocation5], 2048
    $region25: #{tpu_custom_call.1} parent=1 // pred_fallthru
      _
    %558 = vsyncpa [#allocation5], 1

</llo_original>
